<compile_context>
chip_gen: v7x
topology: tpu7x:2x2x1
jax: 0.10.0
libtpu: 0.0.40
codegen_flags: <defaults>
</compile_context>

<pallas_src>
import jax
import jax.numpy as jnp
from jax.experimental import pallas as pl
from jax.experimental.pallas import tpu as pltpu


def _round_up(n, m):
    return (n + m - 1) // m * m


def _pick_tile_b(batch, max_tile_b):
    """Batch-tile size: big tiles (fewer grid steps), 128-aligned for lane-dense
    output stores, and >= 2 grid steps once the batch is big enough so both of
    v7x's TensorCores get work."""
    if batch <= 256:
        return _round_up(batch, 128)          # single small tile
    half = _round_up(pl.cdiv(batch, 2), 128)  # exactly-2-step tile for moderate B
    return min(max_tile_b, half)


def minenet_kernel(x_ref, y_ref,
                   w1x_ref, w1y_ref, b1_ref,
                   w2_ref, b2_ref,
                   w3_ref, b3_ref,
                   out_ref):
    # Layer 1: cat([x, y], 1) @ W1 + b1 == x @ W1[:D] + y @ W1[D:] + b1   (MXU, f32)
    h1 = (jnp.dot(x_ref[...], w1x_ref[...], preferred_element_type=jnp.float32)
          + jnp.dot(y_ref[...], w1y_ref[...], preferred_element_type=jnp.float32)
          + b1_ref[...])
    h1 = jnp.maximum(h1, 0.0)                                   # ReLU (VPU)

    # Layer 2 (MXU, f32)
    h2 = jnp.dot(h1, w2_ref[...], preferred_element_type=jnp.float32) + b2_ref[...]
    h2 = jnp.maximum(h2, 0.0)                                   # ReLU (VPU)

    # Layer 3 (out_features == 1): VPU multiply + lane reduction instead of an
    # N=1 MXU pass; W3 is stored as a (1, H) row.  The per-tile result is
    # written lane-dense as a (1, TILE_B) row so stores are full-width vst,
    # not masked last-dim-1 partial stores.
    t = jnp.sum(h2 * w3_ref[...], axis=-1)                      # (TILE_B,)
    out_ref[...] = t.reshape(1, -1) + b3_ref[0]                 # (1, TILE_B)


def minenet_forward(x, y, params, *, max_tile_b=4096):
    """x, y: [B, D] float32.  Returns [B, 1] float32 (matches the PyTorch module)."""
    B, D = x.shape
    w1x, w1y, b1, w2, b2, w3, b3 = params
    H = w2.shape[0]

    # No extra HBM passes over x/y (no cast, no pad); no-ops when already f32.
    x = jnp.asarray(x, jnp.float32)
    y = jnp.asarray(y, jnp.float32)

    tile_b = _pick_tile_b(B, max_tile_b)
    grid = (pl.cdiv(B, tile_b),)   # ragged tail handled by clipped reads/writes

    out = pl.pallas_call(
        minenet_kernel,
        out_shape=jax.ShapeDtypeStruct((1, B), jnp.float32),
        grid=grid,
        in_specs=[
            pl.BlockSpec((tile_b, D), lambda i: (i, 0)),        # x tile  (pipelined)
            pl.BlockSpec((tile_b, D), lambda i: (i, 0)),        # y tile  (pipelined)
            pl.BlockSpec((D, H), lambda i: (0, 0)),             # W1[:D]  (VMEM-resident)
            pl.BlockSpec((D, H), lambda i: (0, 0)),             # W1[D:]  (VMEM-resident)
            pl.BlockSpec((1, H), lambda i: (0, 0)),             # b1
            pl.BlockSpec((H, H), lambda i: (0, 0)),             # W2
            pl.BlockSpec((1, H), lambda i: (0, 0)),             # b2
            pl.BlockSpec((1, H), lambda i: (0, 0)),             # W3 (stored as a row)
            pl.BlockSpec(memory_space=pltpu.MemorySpace.SMEM),  # b3 scalar in SMEM
        ],
        out_specs=pl.BlockSpec((1, tile_b), lambda i: (0, i)),  # lane-dense output
        compiler_params=pltpu.CompilerParams(
            dimension_semantics=("parallel",),                  # megacore split on v7x
        ),
    )(x, y, w1x, w1y, b1, w2, b2, w3, b3)

    return out.reshape(B, 1)                                    # PyTorch output layout


def init_params(key, input_dim, hidden_dim):
    """Parameters mirroring the PyTorch module, stored kernel-friendly:
    weights as [in, out] (transposed vs. torch's [out, in]); W1 pre-split into
    x/y halves so the concat folds into two dots; W3 kept as a (1, H) row;
    b3 as a (1,) scalar (lives in SMEM).  All float32."""
    k1, k2, k3, k4, k5, k6 = jax.random.split(key, 6)
    d2 = input_dim * 2
    s1 = 1.0 / (d2 ** 0.5)
    s2 = 1.0 / (hidden_dim ** 0.5)
    w1 = jax.random.uniform(k1, (d2, hidden_dim), jnp.float32, -s1, s1)
    b1 = jax.random.uniform(k2, (1, hidden_dim), jnp.float32, -s1, s1)
    w2 = jax.random.uniform(k3, (hidden_dim, hidden_dim), jnp.float32, -s2, s2)
    b2 = jax.random.uniform(k4, (1, hidden_dim), jnp.float32, -s2, s2)
    w3 = jax.random.uniform(k5, (1, hidden_dim), jnp.float32, -s2, s2)   # W3 row
    b3 = jax.random.uniform(k6, (1,), jnp.float32, -s2, s2)
    return (w1[:input_dim], w1[input_dim:], b1, w2, b2, w3, b3)


def minenet_ref(x, y, params):
    """Pure-JAX f32 reference identical to the PyTorch forward."""
    w1x, w1y, b1, w2, b2, w3, b3 = params
    h1 = jnp.maximum(x @ w1x + y @ w1y + b1, 0.0)
    h2 = jnp.maximum(h1 @ w2 + b2, 0.0)
    return jnp.sum(h2 * w3, axis=-1, keepdims=True) + b3[0]


if __name__ == "__main__":
    input_dim, hidden_dim = 16, 32
    key = jax.random.PRNGKey(0)
    kp, kx, ky, kx2, ky2 = jax.random.split(key, 5)
    params = init_params(kp, input_dim, hidden_dim)

    # Case 1: small batch, single grid step.
    B = 128
    x = jax.random.normal(kx, (B, input_dim), jnp.float32)
    y = jax.random.normal(ky, (B, input_dim), jnp.float32)
    out = jax.block_until_ready(minenet_forward(x, y, params))
    ref = minenet_ref(x, y, params)
    assert out.shape == (B, 1), out.shape
    assert jnp.allclose(out, ref, atol=2e-2, rtol=2e-2), "mismatch vs reference (small batch)"

    # Case 2: ragged batch -> two grid steps with a clipped tail tile
    # (the >=2-step layout that lets v7x use both TensorCores).
    B2 = 600
    x2 = jax.random.normal(kx2, (B2, input_dim), jnp.float32)
    y2 = jax.random.normal(ky2, (B2, input_dim), jnp.float32)
    out2 = jax.block_until_ready(minenet_forward(x2, y2, params))
    ref2 = minenet_ref(x2, y2, params)
    assert out2.shape == (B2, 1), out2.shape
    assert jnp.allclose(out2, ref2, atol=2e-2, rtol=2e-2), "mismatch vs reference (ragged batch)"

    print("KERNEL_OK")
</pallas_src>

<mosaic_0001>
module attributes {stable_mosaic.version = 11 : i64} {
  func.func @minenet_kernel(%arg0: i32, %arg1: memref<128x16xf32, #tpu.memory_space<vmem>>, %arg2: memref<128x16xf32, #tpu.memory_space<vmem>>, %arg3: memref<16x32xf32, #tpu.memory_space<vmem>>, %arg4: memref<16x32xf32, #tpu.memory_space<vmem>>, %arg5: memref<1x32xf32, #tpu.memory_space<vmem>>, %arg6: memref<32x32xf32, #tpu.memory_space<vmem>>, %arg7: memref<1x32xf32, #tpu.memory_space<vmem>>, %arg8: memref<1x32xf32, #tpu.memory_space<vmem>>, %arg9: memref<1xf32, #tpu.memory_space<smem>>, %arg10: memref<1x128xf32, #tpu.memory_space<vmem>>) attributes {dimension_semantics = [#tpu.dimension_semantics<parallel>], iteration_bounds = array<i64: 1>, scalar_prefetch = 0 : i64, scratch_operands = 0 : i64, tpu.core_type = #tpu.core_type<tc>, window_params = [{transform_indices = @transform_0, window_bounds = array<i64: 128, 16>}, {transform_indices = @transform_1, window_bounds = array<i64: 128, 16>}, {pipeline_mode = #tpu.pipeline_mode<synchronous>, transform_indices = @transform_2, window_bounds = array<i64: 16, 32>}, {pipeline_mode = #tpu.pipeline_mode<synchronous>, transform_indices = @transform_3, window_bounds = array<i64: 16, 32>}, {pipeline_mode = #tpu.pipeline_mode<synchronous>, transform_indices = @transform_4, window_bounds = array<i64: 1, 32>}, {pipeline_mode = #tpu.pipeline_mode<synchronous>, transform_indices = @transform_5, window_bounds = array<i64: 32, 32>}, {pipeline_mode = #tpu.pipeline_mode<synchronous>, transform_indices = @transform_6, window_bounds = array<i64: 1, 32>}, {pipeline_mode = #tpu.pipeline_mode<synchronous>, transform_indices = @transform_7, window_bounds = array<i64: 1, 32>}, {transform_indices = @transform_8, window_bounds = array<i64: 1>}, {transform_indices = @transform_9, window_bounds = array<i64: 1, 128>}]} {
    %c0 = arith.constant 0 : index
    %c0_0 = arith.constant 0 : index
    %0 = vector.load %arg1[%c0, %c0_0] : memref<128x16xf32, #tpu.memory_space<vmem>>, vector<128x16xf32>
    %c0_1 = arith.constant 0 : index
    %c0_2 = arith.constant 0 : index
    %1 = vector.load %arg3[%c0_1, %c0_2] : memref<16x32xf32, #tpu.memory_space<vmem>>, vector<16x32xf32>
    %cst = arith.constant dense<0.000000e+00> : vector<128x32xf32>
    %2 = tpu.matmul %0, %1, %cst {dimension_numbers = #tpu.dot_dimension_numbers<[1], [0], [0], [1], [0, 0, 1, 1], [], []>} : vector<128x16xf32>, vector<16x32xf32>, vector<128x32xf32> -> vector<128x32xf32>
    %c0_3 = arith.constant 0 : index
    %c0_4 = arith.constant 0 : index
    %3 = vector.load %arg2[%c0_3, %c0_4] : memref<128x16xf32, #tpu.memory_space<vmem>>, vector<128x16xf32>
    %c0_5 = arith.constant 0 : index
    %c0_6 = arith.constant 0 : index
    %4 = vector.load %arg4[%c0_5, %c0_6] : memref<16x32xf32, #tpu.memory_space<vmem>>, vector<16x32xf32>
    %cst_7 = arith.constant dense<0.000000e+00> : vector<128x32xf32>
    %5 = tpu.matmul %3, %4, %cst_7 {dimension_numbers = #tpu.dot_dimension_numbers<[1], [0], [0], [1], [0, 0, 1, 1], [], []>} : vector<128x16xf32>, vector<16x32xf32>, vector<128x32xf32> -> vector<128x32xf32>
    %6 = arith.addf %2, %5 : vector<128x32xf32>
    %c0_8 = arith.constant 0 : index
    %c0_9 = arith.constant 0 : index
    %7 = vector.load %arg5[%c0_8, %c0_9] : memref<1x32xf32, #tpu.memory_space<vmem>>, vector<1x32xf32>
    %8 = vector.broadcast %7 : vector<1x32xf32> to vector<128x32xf32>
    %9 = arith.addf %6, %8 : vector<128x32xf32>
    %cst_10 = arith.constant 0.000000e+00 : f32
    %10 = vector.broadcast %cst_10 : f32 to vector<128x32xf32>
    %11 = arith.maximumf %9, %10 : vector<128x32xf32>
    %c0_11 = arith.constant 0 : index
    %c0_12 = arith.constant 0 : index
    %12 = vector.load %arg6[%c0_11, %c0_12] : memref<32x32xf32, #tpu.memory_space<vmem>>, vector<32x32xf32>
    %cst_13 = arith.constant dense<0.000000e+00> : vector<128x32xf32>
    %13 = tpu.matmul %11, %12, %cst_13 {dimension_numbers = #tpu.dot_dimension_numbers<[1], [0], [0], [1], [0, 0, 1, 1], [], []>} : vector<128x32xf32>, vector<32x32xf32>, vector<128x32xf32> -> vector<128x32xf32>
    %c0_14 = arith.constant 0 : index
    %c0_15 = arith.constant 0 : index
    %14 = vector.load %arg7[%c0_14, %c0_15] : memref<1x32xf32, #tpu.memory_space<vmem>>, vector<1x32xf32>
    %15 = vector.broadcast %14 : vector<1x32xf32> to vector<128x32xf32>
    %16 = arith.addf %13, %15 : vector<128x32xf32>
    %cst_16 = arith.constant 0.000000e+00 : f32
    %17 = vector.broadcast %cst_16 : f32 to vector<128x32xf32>
    %18 = arith.maximumf %16, %17 : vector<128x32xf32>
    %c0_17 = arith.constant 0 : index
    %c0_18 = arith.constant 0 : index
    %19 = vector.load %arg8[%c0_17, %c0_18] : memref<1x32xf32, #tpu.memory_space<vmem>>, vector<1x32xf32>
    %20 = vector.broadcast %19 : vector<1x32xf32> to vector<128x32xf32>
    %21 = arith.mulf %18, %20 : vector<128x32xf32>
    %cst_19 = arith.constant dense<0.000000e+00> : vector<128xf32>
    %22 = vector.multi_reduction <add>, %21, %cst_19 [1] : vector<128x32xf32> to vector<128xf32>
    %23 = vector.shape_cast %22 : vector<128xf32> to vector<1x128xf32>
    %c0_20 = arith.constant 0 : index
    %24 = memref.load %arg9[%c0_20] : memref<1xf32, #tpu.memory_space<smem>>
    %25 = vector.broadcast %24 : f32 to vector<1x128xf32>
    %26 = arith.addf %23, %25 : vector<1x128xf32>
    %c0_21 = arith.constant 0 : index
    %c0_22 = arith.constant 0 : index
    %27 = vector.load %arg10[%c0_21, %c0_22] : memref<1x128xf32, #tpu.memory_space<vmem>>, vector<1x128xf32>
    tpu.vector_store %arg10[%c0_21, %c0_22], %26 {strides = array<i32>} : memref<1x128xf32, #tpu.memory_space<vmem>>, vector<1x128xf32>,
    return
  }
  func.func @transform_0(%arg0: i32) -> (i32, i32) {
    %c0_i32 = arith.constant 0 : i32
    %c0_i32_0 = arith.constant 0 : i32
    return %arg0, %c0_i32 : i32, i32
  }
  func.func @transform_1(%arg0: i32) -> (i32, i32) {
    %c0_i32 = arith.constant 0 : i32
    %c0_i32_0 = arith.constant 0 : i32
    return %arg0, %c0_i32 : i32, i32
  }
  func.func @transform_2(%arg0: i32) -> (i32, i32) {
    %c0_i32 = arith.constant 0 : i32
    %c0_i32_0 = arith.constant 0 : i32
    %c0_i32_1 = arith.constant 0 : i32
    return %c0_i32, %c0_i32_0 : i32, i32
  }
  func.func @transform_3(%arg0: i32) -> (i32, i32) {
    %c0_i32 = arith.constant 0 : i32
    %c0_i32_0 = arith.constant 0 : i32
    %c0_i32_1 = arith.constant 0 : i32
    return %c0_i32, %c0_i32_0 : i32, i32
  }
  func.func @transform_4(%arg0: i32) -> (i32, i32) {
    %c0_i32 = arith.constant 0 : i32
    %c0_i32_0 = arith.constant 0 : i32
    %c0_i32_1 = arith.constant 0 : i32
    return %c0_i32, %c0_i32_0 : i32, i32
  }
  func.func @transform_5(%arg0: i32) -> (i32, i32) {
    %c0_i32 = arith.constant 0 : i32
    %c0_i32_0 = arith.constant 0 : i32
    %c0_i32_1 = arith.constant 0 : i32
    return %c0_i32, %c0_i32_0 : i32, i32
  }
  func.func @transform_6(%arg0: i32) -> (i32, i32) {
    %c0_i32 = arith.constant 0 : i32
    %c0_i32_0 = arith.constant 0 : i32
    %c0_i32_1 = arith.constant 0 : i32
    return %c0_i32, %c0_i32_0 : i32, i32
  }
  func.func @transform_7(%arg0: i32) -> (i32, i32) {
    %c0_i32 = arith.constant 0 : i32
    %c0_i32_0 = arith.constant 0 : i32
    %c0_i32_1 = arith.constant 0 : i32
    return %c0_i32, %c0_i32_0 : i32, i32
  }
  func.func @transform_8(%arg0: i32) -> i32 {
    %c0_i32 = arith.constant 0 : i32
    %c0_i32_0 = arith.constant 0 : i32
    return %c0_i32 : i32
  }
  func.func @transform_9(%arg0: i32) -> (i32, i32) {
    %c0_i32 = arith.constant 0 : i32
    %c0_i32_0 = arith.constant 0 : i32
    return %c0_i32, %arg0 : i32, i32
  }
}

</mosaic_0001>

<llo_original>
// kernel: tpu_custom_call.1
$region0: #{tpu_custom_call.1}
  #allocation0 [shape = 'u32[]', space=smem, size = 0x4, offset = 0x4, fixed_abs, tag = 'smem constant byte address 0x4 - core index']
  #allocation1 [shape = 'u32[144,128]{1,0:T(1,128)}', space=vmem, size = 0x12000, scoped, tag = 'internal scratch']
  #allocation2 [shape = 'f32[1]{0:T(128)S(6)}', space=smem, size = 0x200, scoped, tag = 'scoped memory for tpu_custom_call.1']
  %s0 = inlined_call_operand.vmem [shape: f32[128,16], index: 0, kind: input, shape index: {}]
  %s1 = inlined_call_operand.vmem [shape: f32[128,16], index: 1, kind: input, shape index: {}]
  %s2 = inlined_call_operand.vmem [shape: f32[16,32], index: 2, kind: input, shape index: {}]
  %s3 = inlined_call_operand.vmem [shape: f32[16,32], index: 3, kind: input, shape index: {}]
  %s4 = inlined_call_operand.vmem [shape: f32[1,32], index: 4, kind: input, shape index: {}]
  %s5 = inlined_call_operand.vmem [shape: f32[32,32], index: 5, kind: input, shape index: {}]
  %s6 = inlined_call_operand.vmem [shape: f32[1,32], index: 6, kind: input, shape index: {}]
  %s7 = inlined_call_operand.vmem [shape: f32[1,32], index: 7, kind: input, shape index: {}]
  %s8 = inlined_call_operand.<no memory space> [shape: f32[1], index: 8, kind: input, shape index: {}]
  %s9 = inlined_call_operand.hbm [shape: f32[1,128], index: 9, kind: output, shape index: {}]
  %s10 = sld [smem:[#allocation0]]
  $region46: #{tpu_custom_call.1} parent=0
    _
  %s12 = ssub.s32 1, %s10
  %s13 = scalar_select 0, %s12, %s10
  %14 = sst [smem:[#allocation2]] %s8
  $region1: #{tpu_custom_call.1} parent=0
    #allocation3 [shape = 'u8[512]{0}', space=vmem, size = 0x400, scoped, tag = 'output window, operand 0, single buffered']
    #allocation4 [shape = 's32[1]{0}', space=sflag, size = 0x4, scoped, tag = 'scoped memory for tpu_custom_call.1']
    %15 = vsyncpa [#allocation4], 0
    // Predicated region
    $region2: #{tpu_custom_call.1} parent=1 // pred_check
      _
    $region3: #{tpu_custom_call.1} parent=1 // pred_check_branch
      %17 = sbr.rel (0) target = $region5
    $region4: #{tpu_custom_call.1} parent=1 // pred_region
      _
    $region5: #{tpu_custom_call.1} parent=1 // pred_fallthru
      _
    // Predicated region
    $region6: #{tpu_custom_call.1} parent=1 // pred_check
      _
    $region7: #{tpu_custom_call.1} parent=1 // pred_check_branch
      %19 = sbr.rel (0) target = $region9
    $region8: #{tpu_custom_call.1} parent=1 // pred_region
      _
    $region9: #{tpu_custom_call.1} parent=1 // pred_fallthru
      _
    // Predicated region
    $region10: #{tpu_custom_call.1} parent=1 // pred_check
      _
    $region11: #{tpu_custom_call.1} parent=1 // pred_check_branch
      %21 = sbr.rel (0) target = $region13
    $region12: #{tpu_custom_call.1} parent=1 // pred_region
      _
    $region13: #{tpu_custom_call.1} parent=1 // pred_fallthru
      _
    // Predicated region
    $region14: #{tpu_custom_call.1} parent=1 // pred_check
      _
    $region15: #{tpu_custom_call.1} parent=1 // pred_check_branch
      %23 = sbr.rel (0) target = $region17
    $region16: #{tpu_custom_call.1} parent=1 // pred_region
      _
    $region17: #{tpu_custom_call.1} parent=1 // pred_fallthru
      _
    // Predicated region
    $region18: #{tpu_custom_call.1} parent=1 // pred_check
      _
    $region19: #{tpu_custom_call.1} parent=1 // pred_check_branch
      %25 = sbr.rel (0) target = $region21
    $region20: #{tpu_custom_call.1} parent=1 // pred_region
      _
    $region21: #{tpu_custom_call.1} parent=1 // pred_fallthru
      _
    // Predicated region
    $region22: #{tpu_custom_call.1} parent=1 // pred_check
      _
    $region23: #{tpu_custom_call.1} parent=1 // pred_check_branch
      %27 = sbr.rel (0) target = $region25
    $region24: #{tpu_custom_call.1} parent=1 // pred_region
      _
    $region25: #{tpu_custom_call.1} parent=1 // pred_fallthru
      _
    // Predicated region
    $region26: #{tpu_custom_call.1} parent=1 // pred_check
      _
    $region27: #{tpu_custom_call.1} parent=1 // pred_check_branch
      %29 = sbr.rel (0) target = $region29
    $region28: #{tpu_custom_call.1} parent=1 // pred_region
      _
    $region29: #{tpu_custom_call.1} parent=1 // pred_fallthru
      _
    // Predicated region
    $region30: #{tpu_custom_call.1} parent=1 // pred_check
      _
    $region31: #{tpu_custom_call.1} parent=1 // pred_check_branch
      %31 = sbr.rel (0) target = $region33
    $region32: #{tpu_custom_call.1} parent=1 // pred_region
      _
    $region33: #{tpu_custom_call.1} parent=1 // pred_fallthru
      _
    // Predicated region
    $region34: #{tpu_custom_call.1} parent=1 // pred_check
      _
    $region35: #{tpu_custom_call.1} parent=1 // pred_check_branch
      %33 = sbr.rel (0) target = $region37
    $region36: #{tpu_custom_call.1} parent=1 // pred_region
      _
    $region37: #{tpu_custom_call.1} parent=1 // pred_fallthru
      _
    %v34 = vld [vmem:[%s0] sm:$0xff]
    %v35 = vld [vmem:[%s0 + $0x8] sm:$0xff]
    %v36 = vld [vmem:[%s0 + $0x10] sm:$0xff]
    %v37 = vld [vmem:[%s0 + $0x18] sm:$0xff]
    %v38 = vld [vmem:[%s0 + $0x20] sm:$0xff]
    %v39 = vld [vmem:[%s0 + $0x28] sm:$0xff]
    %v40 = vld [vmem:[%s0 + $0x30] sm:$0xff]
    %v41 = vld [vmem:[%s0 + $0x38] sm:$0xff]
    %v42 = vld [vmem:[%s0 + $0x40] sm:$0xff]
    %v43 = vld [vmem:[%s0 + $0x48] sm:$0xff]
    %v44 = vld [vmem:[%s0 + $0x50] sm:$0xff]
    %v45 = vld [vmem:[%s0 + $0x58] sm:$0xff]
    %v46 = vld [vmem:[%s0 + $0x60] sm:$0xff]
    %v47 = vld [vmem:[%s0 + $0x68] sm:$0xff]
    %v48 = vld [vmem:[%s0 + $0x70] sm:$0xff]
    %v49 = vld [vmem:[%s0 + $0x78] sm:$0xff]
    %v50 = vld [vmem:[%s2] sm:$0xff]
    %v51 = vld [vmem:[%s2 + $0x8] sm:$0xff]
    %v52 = vld [vmem:[%s1] sm:$0xff]
    %v53 = vld [vmem:[%s1 + $0x8] sm:$0xff]
    %v54 = vld [vmem:[%s1 + $0x10] sm:$0xff]
    %v55 = vld [vmem:[%s1 + $0x18] sm:$0xff]
    %v56 = vld [vmem:[%s1 + $0x20] sm:$0xff]
    %v57 = vld [vmem:[%s1 + $0x28] sm:$0xff]
    %v58 = vld [vmem:[%s1 + $0x30] sm:$0xff]
    %v59 = vld [vmem:[%s1 + $0x38] sm:$0xff]
    %v60 = vld [vmem:[%s1 + $0x40] sm:$0xff]
    %v61 = vld [vmem:[%s1 + $0x48] sm:$0xff]
    %v62 = vld [vmem:[%s1 + $0x50] sm:$0xff]
    %v63 = vld [vmem:[%s1 + $0x58] sm:$0xff]
    %v64 = vld [vmem:[%s1 + $0x60] sm:$0xff]
    %v65 = vld [vmem:[%s1 + $0x68] sm:$0xff]
    %v66 = vld [vmem:[%s1 + $0x70] sm:$0xff]
    %v67 = vld [vmem:[%s1 + $0x78] sm:$0xff]
    %v68 = vld [vmem:[%s3] sm:$0xff]
    %v69 = vld [vmem:[%s3 + $0x8] sm:$0xff]
    %vm70 = vcmask 130048
    %v72 = vsel %vm70, %v52, 0
    %v75 = vsel %vm70, %v53, 0
    %v78 = vsel %vm70, %v54, 0
    %v81 = vsel %vm70, %v55, 0
    %v84 = vsel %vm70, %v56, 0
    %v87 = vsel %vm70, %v57, 0
    %v90 = vsel %vm70, %v58, 0
    %v93 = vsel %vm70, %v59, 0
    %v96 = vsel %vm70, %v60, 0
    %v99 = vsel %vm70, %v61, 0
    %v102 = vsel %vm70, %v62, 0
    %v105 = vsel %vm70, %v63, 0
    %v108 = vsel %vm70, %v64, 0
    %v111 = vsel %vm70, %v65, 0
    %v114 = vsel %vm70, %v66, 0
    %v117 = vsel %vm70, %v67, 0
    %119 = vmatprep.subr.mxu0 0.0
    %120 = vmatpush1.msra.mxu0 %v68
    %121 = vmatprep.subr.mxu0 0.0
    %122 = vmatpush1.msra.mxu0 %v69
    %123 = vmatprep.subr.mxu0 0.0
    %124 = vmatpush1.msra.mxu0 0.0
    %125 = vmatprep.subr.mxu0 0.0
    %126 = vmatpush1.msra.mxu0 0.0
    %127 = vmatprep.subr.mxu0 0.0
    %128 = vmatpush1.msra.mxu0 0.0
    %129 = vmatprep.subr.mxu0 0.0
    %130 = vmatpush1.msra.mxu0 0.0
    %131 = vmatprep.subr.mxu0 0.0
    %132 = vmatpush1.msra.mxu0 0.0
    %133 = vmatprep.subr.mxu0 0.0
    %134 = vmatpush1.msra.mxu0 0.0
    %135 = vmatprep.subr.mxu0 0.0
    %136 = vmatpush1.msra.mxu0 0.0
    %137 = vmatprep.subr.mxu0 0.0
    %138 = vmatpush1.msra.mxu0 0.0
    %139 = vmatprep.subr.mxu0 0.0
    %140 = vmatpush1.msra.mxu0 0.0
    %141 = vmatprep.subr.mxu0 0.0
    %142 = vmatpush1.msra.mxu0 0.0
    %143 = vmatprep.subr.mxu0 0.0
    %144 = vmatpush1.msra.mxu0 0.0
    %145 = vmatprep.subr.mxu0 0.0
    %146 = vmatpush1.msra.mxu0 0.0
    %147 = vmatprep.subr.mxu0 0.0
    %148 = vmatpush1.msra.mxu0 0.0
    %149 = vmatprep.subr.mxu0 0.0
    %150 = vmatpush1.msra.mxu0 0.0
    %151 = vmatprep.subr.mxu0 0.0
    %152 = vmatpush1.msra.mxu0 0.0
    %153 = vmatprep.subr.mxu0 0.0
    %154 = vmatpush1.msra.mxu0 0.0
    %155 = vmatprep.subr.mxu0 0.0
    %156 = vmatpush1.msra.mxu0 0.0
    %157 = vmatprep.subr.mxu0 0.0
    %158 = vmatpush1.msra.mxu0 0.0
    %159 = vmatprep.subr.mxu0 0.0
    %160 = vmatpush1.msra.mxu0 0.0
    %161 = vmatprep.subr.mxu0 0.0
    %162 = vmatpush1.msra.mxu0 0.0
    %163 = vmatprep.subr.mxu0 0.0
    %164 = vmatpush1.msra.mxu0 0.0
    %165 = vmatprep.subr.mxu0 0.0
    %166 = vmatpush1.msra.mxu0 0.0
    %167 = vmatprep.subr.mxu0 0.0
    %168 = vmatpush1.msra.mxu0 0.0
    %169 = vmatprep.subr.mxu0 0.0
    %170 = vmatpush1.msra.mxu0 0.0
    %171 = vmatprep.subr.mxu0 0.0
    %172 = vmatpush1.msra.mxu0 0.0
    %173 = vmatprep.subr.mxu0 0.0
    %174 = vmatpush1.msra.mxu0 0.0
    %175 = vmatprep.subr.mxu0 0.0
    %176 = vmatpush1.msra.mxu0 0.0
    %177 = vmatprep.subr.mxu0 0.0
    %178 = vmatpush1.msra.mxu0 0.0
    %179 = vmatprep.subr.mxu0 0.0
    %180 = vmatpush1.msra.mxu0 0.0
    %181 = vmatprep.subr.mxu0 0.0
    %182 = vmatpush1.msra.mxu0 0.0
    %183 = vmatprep.mubr.f32.mxu0 0.0
    %184 = vmatmul.mubr.f32.gmra.mrb[0].mxu0 %v72
    %v185 = vpop.f32.mrb[0].mxu0
    %v186 = vadd.f32 0.0, %v185
    %v187 = vpop.f32.mrb[0].mxu0
    %188 = vmatprep.mubr.f32.mxu0 0.0
    %189 = vmatmul.mubr.f32.gmra.mrb[0].mxu0 %v75
    %v190 = vpop.f32.mrb[0].mxu0
    %v191 = vadd.f32 0.0, %v190
    %v192 = vpop.f32.mrb[0].mxu0
    %193 = vmatprep.mubr.f32.mxu0 0.0
    %194 = vmatmul.mubr.f32.gmra.mrb[0].mxu0 %v78
    %v195 = vpop.f32.mrb[0].mxu0
    %v196 = vadd.f32 0.0, %v195
    %v197 = vpop.f32.mrb[0].mxu0
    %198 = vmatprep.mubr.f32.mxu0 0.0
    %199 = vmatmul.mubr.f32.gmra.mrb[0].mxu0 %v81
    %v200 = vpop.f32.mrb[0].mxu0
    %v201 = vadd.f32 0.0, %v200
    %v202 = vpop.f32.mrb[0].mxu0
    %203 = vmatprep.mubr.f32.mxu0 0.0
    %204 = vmatmul.mubr.f32.gmra.mrb[0].mxu0 %v84
    %v205 = vpop.f32.mrb[0].mxu0
    %v206 = vadd.f32 0.0, %v205
    %v207 = vpop.f32.mrb[0].mxu0
    %208 = vmatprep.mubr.f32.mxu0 0.0
    %209 = vmatmul.mubr.f32.gmra.mrb[0].mxu0 %v87
    %v210 = vpop.f32.mrb[0].mxu0
    %v211 = vadd.f32 0.0, %v210
    %v212 = vpop.f32.mrb[0].mxu0
    %213 = vmatprep.mubr.f32.mxu0 0.0
    %214 = vmatmul.mubr.f32.gmra.mrb[0].mxu0 %v90
    %v215 = vpop.f32.mrb[0].mxu0
    %v216 = vadd.f32 0.0, %v215
    %v217 = vpop.f32.mrb[0].mxu0
    %218 = vmatprep.mubr.f32.mxu0 0.0
    %219 = vmatmul.mubr.f32.gmra.mrb[0].mxu0 %v93
    %v220 = vpop.f32.mrb[0].mxu0
    %v221 = vadd.f32 0.0, %v220
    %v222 = vpop.f32.mrb[0].mxu0
    %223 = vmatprep.mubr.f32.mxu0 0.0
    %224 = vmatmul.mubr.f32.gmra.mrb[0].mxu0 %v96
    %v225 = vpop.f32.mrb[0].mxu0
    %v226 = vadd.f32 0.0, %v225
    %v227 = vpop.f32.mrb[0].mxu0
    %228 = vmatprep.mubr.f32.mxu0 0.0
    %229 = vmatmul.mubr.f32.gmra.mrb[0].mxu0 %v99
    %v230 = vpop.f32.mrb[0].mxu0
    %v231 = vadd.f32 0.0, %v230
    %v232 = vpop.f32.mrb[0].mxu0
    %233 = vmatprep.mubr.f32.mxu0 0.0
    %234 = vmatmul.mubr.f32.gmra.mrb[0].mxu0 %v102
    %v235 = vpop.f32.mrb[0].mxu0
    %v236 = vadd.f32 0.0, %v235
    %v237 = vpop.f32.mrb[0].mxu0
    %238 = vmatprep.mubr.f32.mxu0 0.0
    %239 = vmatmul.mubr.f32.gmra.mrb[0].mxu0 %v105
    %v240 = vpop.f32.mrb[0].mxu0
    %v241 = vadd.f32 0.0, %v240
    %v242 = vpop.f32.mrb[0].mxu0
    %243 = vmatprep.mubr.f32.mxu0 0.0
    %244 = vmatmul.mubr.f32.gmra.mrb[0].mxu0 %v108
    %v245 = vpop.f32.mrb[0].mxu0
    %v246 = vadd.f32 0.0, %v245
    %v247 = vpop.f32.mrb[0].mxu0
    %248 = vmatprep.mubr.f32.mxu0 0.0
    %249 = vmatmul.mubr.f32.gmra.mrb[0].mxu0 %v111
    %v250 = vpop.f32.mrb[0].mxu0
    %v251 = vadd.f32 0.0, %v250
    %v252 = vpop.f32.mrb[0].mxu0
    %253 = vmatprep.mubr.f32.mxu0 0.0
    %254 = vmatmul.mubr.f32.gmra.mrb[0].mxu0 %v114
    %v255 = vpop.f32.mrb[0].mxu0
    %v256 = vadd.f32 0.0, %v255
    %v257 = vpop.f32.mrb[0].mxu0
    %258 = vmatprep.mubr.f32.mxu0 0.0
    %259 = vmatmul.mubr.f32.gmra.mrb[0].mxu0 %v117
    %v260 = vpop.f32.mrb[0].mxu0
    %v261 = vadd.f32 0.0, %v260
    %v262 = vpop.f32.mrb[0].mxu0
    %263 = vdwg.mxu0
    %v265 = vsel %vm70, %v34, 0
    %v268 = vsel %vm70, %v35, 0
    %v271 = vsel %vm70, %v36, 0
    %v274 = vsel %vm70, %v37, 0
    %v277 = vsel %vm70, %v38, 0
    %v280 = vsel %vm70, %v39, 0
    %v283 = vsel %vm70, %v40, 0
    %v286 = vsel %vm70, %v41, 0
    %v289 = vsel %vm70, %v42, 0
    %v292 = vsel %vm70, %v43, 0
    %v295 = vsel %vm70, %v44, 0
    %v298 = vsel %vm70, %v45, 0
    %v301 = vsel %vm70, %v46, 0
    %v304 = vsel %vm70, %v47, 0
    %v307 = vsel %vm70, %v48, 0
    %v310 = vsel %vm70, %v49, 0
    %312 = vmatprep.subr.mxu0 0.0
    %313 = vmatpush1.msra.mxu0 %v50
    %314 = vmatprep.subr.mxu0 0.0
    %315 = vmatpush1.msra.mxu0 %v51
    %316 = vmatprep.subr.mxu0 0.0
    %317 = vmatpush1.msra.mxu0 0.0
    %318 = vmatprep.subr.mxu0 0.0
    %319 = vmatpush1.msra.mxu0 0.0
    %320 = vmatprep.subr.mxu0 0.0
    %321 = vmatpush1.msra.mxu0 0.0
    %322 = vmatprep.subr.mxu0 0.0
    %323 = vmatpush1.msra.mxu0 0.0
    %324 = vmatprep.subr.mxu0 0.0
    %325 = vmatpush1.msra.mxu0 0.0
    %326 = vmatprep.subr.mxu0 0.0
    %327 = vmatpush1.msra.mxu0 0.0
    %328 = vmatprep.subr.mxu0 0.0
    %329 = vmatpush1.msra.mxu0 0.0
    %330 = vmatprep.subr.mxu0 0.0
    %331 = vmatpush1.msra.mxu0 0.0
    %332 = vmatprep.subr.mxu0 0.0
    %333 = vmatpush1.msra.mxu0 0.0
    %334 = vmatprep.subr.mxu0 0.0
    %335 = vmatpush1.msra.mxu0 0.0
    %336 = vmatprep.subr.mxu0 0.0
    %337 = vmatpush1.msra.mxu0 0.0
    %338 = vmatprep.subr.mxu0 0.0
    %339 = vmatpush1.msra.mxu0 0.0
    %340 = vmatprep.subr.mxu0 0.0
    %341 = vmatpush1.msra.mxu0 0.0
    %342 = vmatprep.subr.mxu0 0.0
    %343 = vmatpush1.msra.mxu0 0.0
    %344 = vmatprep.subr.mxu0 0.0
    %345 = vmatpush1.msra.mxu0 0.0
    %346 = vmatprep.subr.mxu0 0.0
    %347 = vmatpush1.msra.mxu0 0.0
    %348 = vmatprep.subr.mxu0 0.0
    %349 = vmatpush1.msra.mxu0 0.0
    %350 = vmatprep.subr.mxu0 0.0
    %351 = vmatpush1.msra.mxu0 0.0
    %352 = vmatprep.subr.mxu0 0.0
    %353 = vmatpush1.msra.mxu0 0.0
    %354 = vmatprep.subr.mxu0 0.0
    %355 = vmatpush1.msra.mxu0 0.0
    %356 = vmatprep.subr.mxu0 0.0
    %357 = vmatpush1.msra.mxu0 0.0
    %358 = vmatprep.subr.mxu0 0.0
    %359 = vmatpush1.msra.mxu0 0.0
    %360 = vmatprep.subr.mxu0 0.0
    %361 = vmatpush1.msra.mxu0 0.0
    %362 = vmatprep.subr.mxu0 0.0
    %363 = vmatpush1.msra.mxu0 0.0
    %364 = vmatprep.subr.mxu0 0.0
    %365 = vmatpush1.msra.mxu0 0.0
    %366 = vmatprep.subr.mxu0 0.0
    %367 = vmatpush1.msra.mxu0 0.0
    %368 = vmatprep.subr.mxu0 0.0
    %369 = vmatpush1.msra.mxu0 0.0
    %370 = vmatprep.subr.mxu0 0.0
    %371 = vmatpush1.msra.mxu0 0.0
    %372 = vmatprep.subr.mxu0 0.0
    %373 = vmatpush1.msra.mxu0 0.0
    %374 = vmatprep.subr.mxu0 0.0
    %375 = vmatpush1.msra.mxu0 0.0
    %376 = vmatprep.mubr.f32.mxu0 0.0
    %377 = vmatmul.mubr.f32.gmra.mrb[0].mxu0 %v265
    %v378 = vpop.f32.mrb[0].mxu0
    %v379 = vadd.f32 %v186, %v378
    %v380 = vpop.f32.mrb[0].mxu0
    %381 = vmatprep.mubr.f32.mxu0 0.0
    %382 = vmatmul.mubr.f32.gmra.mrb[0].mxu0 %v268
    %v383 = vpop.f32.mrb[0].mxu0
    %v384 = vadd.f32 %v191, %v383
    %v385 = vpop.f32.mrb[0].mxu0
    %386 = vmatprep.mubr.f32.mxu0 0.0
    %387 = vmatmul.mubr.f32.gmra.mrb[0].mxu0 %v271
    %v388 = vpop.f32.mrb[0].mxu0
    %v389 = vadd.f32 %v196, %v388
    %v390 = vpop.f32.mrb[0].mxu0
    %391 = vmatprep.mubr.f32.mxu0 0.0
    %392 = vmatmul.mubr.f32.gmra.mrb[0].mxu0 %v274
    %v393 = vpop.f32.mrb[0].mxu0
    %v394 = vadd.f32 %v201, %v393
    %v395 = vpop.f32.mrb[0].mxu0
    %396 = vmatprep.mubr.f32.mxu0 0.0
    %397 = vmatmul.mubr.f32.gmra.mrb[0].mxu0 %v277
    %v398 = vpop.f32.mrb[0].mxu0
    %v399 = vadd.f32 %v206, %v398
    %v400 = vpop.f32.mrb[0].mxu0
    %401 = vmatprep.mubr.f32.mxu0 0.0
    %402 = vmatmul.mubr.f32.gmra.mrb[0].mxu0 %v280
    %v403 = vpop.f32.mrb[0].mxu0
    %v404 = vadd.f32 %v211, %v403
    %v405 = vpop.f32.mrb[0].mxu0
    %406 = vmatprep.mubr.f32.mxu0 0.0
    %407 = vmatmul.mubr.f32.gmra.mrb[0].mxu0 %v283
    %v408 = vpop.f32.mrb[0].mxu0
    %v409 = vadd.f32 %v216, %v408
    %v410 = vpop.f32.mrb[0].mxu0
    %411 = vmatprep.mubr.f32.mxu0 0.0
    %412 = vmatmul.mubr.f32.gmra.mrb[0].mxu0 %v286
    %v413 = vpop.f32.mrb[0].mxu0
    %v414 = vadd.f32 %v221, %v413
    %v415 = vpop.f32.mrb[0].mxu0
    %416 = vmatprep.mubr.f32.mxu0 0.0
    %417 = vmatmul.mubr.f32.gmra.mrb[0].mxu0 %v289
    %v418 = vpop.f32.mrb[0].mxu0
    %v419 = vadd.f32 %v226, %v418
    %v420 = vpop.f32.mrb[0].mxu0
    %421 = vmatprep.mubr.f32.mxu0 0.0
    %422 = vmatmul.mubr.f32.gmra.mrb[0].mxu0 %v292
    %v423 = vpop.f32.mrb[0].mxu0
    %v424 = vadd.f32 %v231, %v423
    %v425 = vpop.f32.mrb[0].mxu0
    %426 = vmatprep.mubr.f32.mxu0 0.0
    %427 = vmatmul.mubr.f32.gmra.mrb[0].mxu0 %v295
    %v428 = vpop.f32.mrb[0].mxu0
    %v429 = vadd.f32 %v236, %v428
    %v430 = vpop.f32.mrb[0].mxu0
    %431 = vmatprep.mubr.f32.mxu0 0.0
    %432 = vmatmul.mubr.f32.gmra.mrb[0].mxu0 %v298
    %v433 = vpop.f32.mrb[0].mxu0
    %v434 = vadd.f32 %v241, %v433
    %v435 = vpop.f32.mrb[0].mxu0
    %436 = vmatprep.mubr.f32.mxu0 0.0
    %437 = vmatmul.mubr.f32.gmra.mrb[0].mxu0 %v301
    %v438 = vpop.f32.mrb[0].mxu0
    %v439 = vadd.f32 %v246, %v438
    %v440 = vpop.f32.mrb[0].mxu0
    %441 = vmatprep.mubr.f32.mxu0 0.0
    %442 = vmatmul.mubr.f32.gmra.mrb[0].mxu0 %v304
    %v443 = vpop.f32.mrb[0].mxu0
    %v444 = vadd.f32 %v251, %v443
    %v445 = vpop.f32.mrb[0].mxu0
    %446 = vmatprep.mubr.f32.mxu0 0.0
    %447 = vmatmul.mubr.f32.gmra.mrb[0].mxu0 %v307
    %v448 = vpop.f32.mrb[0].mxu0
    %v449 = vadd.f32 %v256, %v448
    %v450 = vpop.f32.mrb[0].mxu0
    %451 = vmatprep.mubr.f32.mxu0 0.0
    %452 = vmatmul.mubr.f32.gmra.mrb[0].mxu0 %v310
    %v453 = vpop.f32.mrb[0].mxu0
    %v454 = vadd.f32 %v261, %v453
    %v455 = vpop.f32.mrb[0].mxu0
    %456 = vdwg.mxu0
    %v457 = vld [vmem:[%s4] sm:$0x1]
    %v459 = vlaneseq
    %v460 = vshrl.u32 %v459, 7
    %v461 = vsub.s32 0, %v460
    %v462 = vrot.slane %v457, %v461
    %v464 = vadd.f32 %v379, %v462
    %v465 = vadd.f32 %v384, %v462
    %v466 = vadd.f32 %v389, %v462
    %v467 = vadd.f32 %v394, %v462
    %v468 = vadd.f32 %v399, %v462
    %v469 = vadd.f32 %v404, %v462
    %v470 = vadd.f32 %v409, %v462
    %v471 = vadd.f32 %v414, %v462
    %v472 = vadd.f32 %v419, %v462
    %v473 = vadd.f32 %v424, %v462
    %v474 = vadd.f32 %v429, %v462
    %v475 = vadd.f32 %v434, %v462
    %v476 = vadd.f32 %v439, %v462
    %v477 = vadd.f32 %v444, %v462
    %v478 = vadd.f32 %v449, %v462
    %v479 = vadd.f32 %v454, %v462
    %v480 = vmax.f32 %v464, 0.0
    %v481 = vmax.f32 %v465, 0.0
    %v482 = vmax.f32 %v466, 0.0
    %v483 = vmax.f32 %v467, 0.0
    %v484 = vmax.f32 %v468, 0.0
    %v485 = vmax.f32 %v469, 0.0
    %v486 = vmax.f32 %v470, 0.0
    %v487 = vmax.f32 %v471, 0.0
    %v488 = vmax.f32 %v472, 0.0
    %v489 = vmax.f32 %v473, 0.0
    %v490 = vmax.f32 %v474, 0.0
    %v491 = vmax.f32 %v475, 0.0
    %v492 = vmax.f32 %v476, 0.0
    %v493 = vmax.f32 %v477, 0.0
    %v494 = vmax.f32 %v478, 0.0
    %v495 = vmax.f32 %v479, 0.0
    %v496 = vld [vmem:[%s5] sm:$0xff]
    %v497 = vld [vmem:[%s5 + $0x8] sm:$0xff]
    %v498 = vld [vmem:[%s5 + $0x10] sm:$0xff]
    %v499 = vld [vmem:[%s5 + $0x18] sm:$0xff]
    %v500 = vld [vmem:[%s6] sm:$0x1]
    %v502 = vlaneseq
    %v503 = vshrl.u32 %v502, 7
    %v504 = vsub.s32 0, %v503
    %v505 = vrot.slane %v500, %v504
    %vm507 = vcmask 261120
    %v509 = vsel %vm507, %v480, 0
    %v512 = vsel %vm507, %v481, 0
    %v515 = vsel %vm507, %v482, 0
    %v518 = vsel %vm507, %v483, 0
    %v521 = vsel %vm507, %v484, 0
    %v524 = vsel %vm507, %v485, 0
    %v527 = vsel %vm507, %v486, 0
    %v530 = vsel %vm507, %v487, 0
    %v533 = vsel %vm507, %v488, 0
    %v536 = vsel %vm507, %v489, 0
    %v539 = vsel %vm507, %v490, 0
    %v542 = vsel %vm507, %v491, 0
    %v545 = vsel %vm507, %v492, 0
    %v548 = vsel %vm507, %v493, 0
    %v551 = vsel %vm507, %v494, 0
    %v554 = vsel %vm507, %v495, 0
    %556 = vmatprep.subr.mxu0 0.0
    %557 = vmatpush1.msra.mxu0 %v496
    %558 = vmatprep.subr.mxu0 0.0
    %559 = vmatpush1.msra.mxu0 %v497
    %560 = vmatprep.subr.mxu0 0.0
    %561 = vmatpush1.msra.mxu0 %v498
    %562 = vmatprep.subr.mxu0 0.0
    %563 = vmatpush1.msra.mxu0 %v499
    %564 = vmatprep.subr.mxu0 0.0
    %565 = vmatpush1.msra.mxu0 0.0
    %566 = vmatprep.subr.mxu0 0.0
    %567 = vmatpush1.msra.mxu0 0.0
    %568 = vmatprep.subr.mxu0 0.0
    %569 = vmatpush1.msra.mxu0 0.0
    %570 = vmatprep.subr.mxu0 0.0
    %571 = vmatpush1.msra.mxu0 0.0
    %572 = vmatprep.subr.mxu0 0.0
    %573 = vmatpush1.msra.mxu0 0.0
    %574 = vmatprep.subr.mxu0 0.0
    %575 = vmatpush1.msra.mxu0 0.0
    %576 = vmatprep.subr.mxu0 0.0
    %577 = vmatpush1.msra.mxu0 0.0
    %578 = vmatprep.subr.mxu0 0.0
    %579 = vmatpush1.msra.mxu0 0.0
    %580 = vmatprep.subr.mxu0 0.0
    %581 = vmatpush1.msra.mxu0 0.0
    %582 = vmatprep.subr.mxu0 0.0
    %583 = vmatpush1.msra.mxu0 0.0
    %584 = vmatprep.subr.mxu0 0.0
    %585 = vmatpush1.msra.mxu0 0.0
    %586 = vmatprep.subr.mxu0 0.0
    %587 = vmatpush1.msra.mxu0 0.0
    %588 = vmatprep.subr.mxu0 0.0
    %589 = vmatpush1.msra.mxu0 0.0
    %590 = vmatprep.subr.mxu0 0.0
    %591 = vmatpush1.msra.mxu0 0.0
    %592 = vmatprep.subr.mxu0 0.0
    %593 = vmatpush1.msra.mxu0 0.0
    %594 = vmatprep.subr.mxu0 0.0
    %595 = vmatpush1.msra.mxu0 0.0
    %596 = vmatprep.subr.mxu0 0.0
    %597 = vmatpush1.msra.mxu0 0.0
    %598 = vmatprep.subr.mxu0 0.0
    %599 = vmatpush1.msra.mxu0 0.0
    %600 = vmatprep.subr.mxu0 0.0
    %601 = vmatpush1.msra.mxu0 0.0
    %602 = vmatprep.subr.mxu0 0.0
    %603 = vmatpush1.msra.mxu0 0.0
    %604 = vmatprep.subr.mxu0 0.0
    %605 = vmatpush1.msra.mxu0 0.0
    %606 = vmatprep.subr.mxu0 0.0
    %607 = vmatpush1.msra.mxu0 0.0
    %608 = vmatprep.subr.mxu0 0.0
    %609 = vmatpush1.msra.mxu0 0.0
    %610 = vmatprep.subr.mxu0 0.0
    %611 = vmatpush1.msra.mxu0 0.0
    %612 = vmatprep.subr.mxu0 0.0
    %613 = vmatpush1.msra.mxu0 0.0
    %614 = vmatprep.subr.mxu0 0.0
    %615 = vmatpush1.msra.mxu0 0.0
    %616 = vmatprep.subr.mxu0 0.0
    %617 = vmatpush1.msra.mxu0 0.0
    %618 = vmatprep.subr.mxu0 0.0
    %619 = vmatpush1.msra.mxu0 0.0
    %620 = vmatprep.mubr.f32.mxu0 0.0
    %621 = vmatmul.mubr.f32.gmra.mrb[0].mxu0 %v509
    %v622 = vpop.f32.mrb[0].mxu0
    %v623 = vadd.f32 %v505, %v622
    %v624 = vpop.f32.mrb[0].mxu0
    %625 = vmatprep.mubr.f32.mxu0 0.0
    %626 = vmatmul.mubr.f32.gmra.mrb[0].mxu0 %v512
    %v627 = vpop.f32.mrb[0].mxu0
    %v628 = vadd.f32 %v505, %v627
    %v629 = vpop.f32.mrb[0].mxu0
    %630 = vmatprep.mubr.f32.mxu0 0.0
    %631 = vmatmul.mubr.f32.gmra.mrb[0].mxu0 %v515
    %v632 = vpop.f32.mrb[0].mxu0
    %v633 = vadd.f32 %v505, %v632
    %v634 = vpop.f32.mrb[0].mxu0
    %635 = vmatprep.mubr.f32.mxu0 0.0
    %636 = vmatmul.mubr.f32.gmra.mrb[0].mxu0 %v518
    %v637 = vpop.f32.mrb[0].mxu0
    %v638 = vadd.f32 %v505, %v637
    %v639 = vpop.f32.mrb[0].mxu0
    %640 = vmatprep.mubr.f32.mxu0 0.0
    %641 = vmatmul.mubr.f32.gmra.mrb[0].mxu0 %v521
    %v642 = vpop.f32.mrb[0].mxu0
    %v643 = vadd.f32 %v505, %v642
    %v644 = vpop.f32.mrb[0].mxu0
    %645 = vmatprep.mubr.f32.mxu0 0.0
    %646 = vmatmul.mubr.f32.gmra.mrb[0].mxu0 %v524
    %v647 = vpop.f32.mrb[0].mxu0
    %v648 = vadd.f32 %v505, %v647
    %v649 = vpop.f32.mrb[0].mxu0
    %650 = vmatprep.mubr.f32.mxu0 0.0
    %651 = vmatmul.mubr.f32.gmra.mrb[0].mxu0 %v527
    %v652 = vpop.f32.mrb[0].mxu0
    %v653 = vadd.f32 %v505, %v652
    %v654 = vpop.f32.mrb[0].mxu0
    %655 = vmatprep.mubr.f32.mxu0 0.0
    %656 = vmatmul.mubr.f32.gmra.mrb[0].mxu0 %v530
    %v657 = vpop.f32.mrb[0].mxu0
    %v658 = vadd.f32 %v505, %v657
    %v659 = vpop.f32.mrb[0].mxu0
    %660 = vmatprep.mubr.f32.mxu0 0.0
    %661 = vmatmul.mubr.f32.gmra.mrb[0].mxu0 %v533
    %v662 = vpop.f32.mrb[0].mxu0
    %v663 = vadd.f32 %v505, %v662
    %v664 = vpop.f32.mrb[0].mxu0
    %665 = vmatprep.mubr.f32.mxu0 0.0
    %666 = vmatmul.mubr.f32.gmra.mrb[0].mxu0 %v536
    %v667 = vpop.f32.mrb[0].mxu0
    %v668 = vadd.f32 %v505, %v667
    %v669 = vpop.f32.mrb[0].mxu0
    %670 = vmatprep.mubr.f32.mxu0 0.0
    %671 = vmatmul.mubr.f32.gmra.mrb[0].mxu0 %v539
    %v672 = vpop.f32.mrb[0].mxu0
    %v673 = vadd.f32 %v505, %v672
    %v674 = vpop.f32.mrb[0].mxu0
    %675 = vmatprep.mubr.f32.mxu0 0.0
    %676 = vmatmul.mubr.f32.gmra.mrb[0].mxu0 %v542
    %v677 = vpop.f32.mrb[0].mxu0
    %v678 = vadd.f32 %v505, %v677
    %v679 = vpop.f32.mrb[0].mxu0
    %680 = vmatprep.mubr.f32.mxu0 0.0
    %681 = vmatmul.mubr.f32.gmra.mrb[0].mxu0 %v545
    %v682 = vpop.f32.mrb[0].mxu0
    %v683 = vadd.f32 %v505, %v682
    %v684 = vpop.f32.mrb[0].mxu0
    %685 = vmatprep.mubr.f32.mxu0 0.0
    %686 = vmatmul.mubr.f32.gmra.mrb[0].mxu0 %v548
    %v687 = vpop.f32.mrb[0].mxu0
    %v688 = vadd.f32 %v505, %v687
    %v689 = vpop.f32.mrb[0].mxu0
    %690 = vmatprep.mubr.f32.mxu0 0.0
    %691 = vmatmul.mubr.f32.gmra.mrb[0].mxu0 %v551
    %v692 = vpop.f32.mrb[0].mxu0
    %v693 = vadd.f32 %v505, %v692
    %v694 = vpop.f32.mrb[0].mxu0
    %695 = vmatprep.mubr.f32.mxu0 0.0
    %696 = vmatmul.mubr.f32.gmra.mrb[0].mxu0 %v554
    %v697 = vpop.f32.mrb[0].mxu0
    %v698 = vadd.f32 %v505, %v697
    %v699 = vpop.f32.mrb[0].mxu0
    %700 = vdwg.mxu0
    %v701 = vmax.f32 %v623, 0.0
    %v702 = vmax.f32 %v628, 0.0
    %v703 = vmax.f32 %v633, 0.0
    %v704 = vmax.f32 %v638, 0.0
    %v705 = vmax.f32 %v643, 0.0
    %v706 = vmax.f32 %v648, 0.0
    %v707 = vmax.f32 %v653, 0.0
    %v708 = vmax.f32 %v658, 0.0
    %v709 = vmax.f32 %v663, 0.0
    %v710 = vmax.f32 %v668, 0.0
    %v711 = vmax.f32 %v673, 0.0
    %v712 = vmax.f32 %v678, 0.0
    %v713 = vmax.f32 %v683, 0.0
    %v714 = vmax.f32 %v688, 0.0
    %v715 = vmax.f32 %v693, 0.0
    %v716 = vmax.f32 %v698, 0.0
    %v717 = vld [vmem:[%s7] sm:$0x1]
    %v719 = vlaneseq
    %v720 = vshrl.u32 %v719, 7
    %v721 = vsub.s32 0, %v720
    %v722 = vrot.slane %v717, %v721
    %v724 = vmul.f32 %v701, %v722
    %v725 = vmul.f32 %v702, %v722
    %v726 = vmul.f32 %v703, %v722
    %v727 = vmul.f32 %v704, %v722
    %v728 = vmul.f32 %v705, %v722
    %v729 = vmul.f32 %v706, %v722
    %v730 = vmul.f32 %v707, %v722
    %v731 = vmul.f32 %v708, %v722
    %v732 = vmul.f32 %v709, %v722
    %v733 = vmul.f32 %v710, %v722
    %v734 = vmul.f32 %v711, %v722
    %v735 = vmul.f32 %v712, %v722
    %v736 = vmul.f32 %v713, %v722
    %v737 = vmul.f32 %v714, %v722
    %v738 = vmul.f32 %v715, %v722
    %v739 = vmul.f32 %v716, %v722
    %v740 = vsel %vm507, %v724, 0.0
    %741 = vadd.xlane.f32.xlu0 %v740
    %v742 = vpop.xlane.xlu0 %741
    %v743 = vsel %vm507, %v725, 0.0
    %744 = vadd.xlane.f32.xlu0 %v743
    %v745 = vpop.xlane.xlu0 %744
    %v746 = vsel %vm507, %v726, 0.0
    %747 = vadd.xlane.f32.xlu0 %v746
    %v748 = vpop.xlane.xlu0 %747
    %v749 = vsel %vm507, %v727, 0.0
    %750 = vadd.xlane.f32.xlu0 %v749
    %v751 = vpop.xlane.xlu0 %750
    %v752 = vsel %vm507, %v728, 0.0
    %753 = vadd.xlane.f32.xlu0 %v752
    %v754 = vpop.xlane.xlu0 %753
    %v755 = vsel %vm507, %v729, 0.0
    %756 = vadd.xlane.f32.xlu0 %v755
    %v757 = vpop.xlane.xlu0 %756
    %v758 = vsel %vm507, %v730, 0.0
    %759 = vadd.xlane.f32.xlu0 %v758
    %v760 = vpop.xlane.xlu0 %759
    %v761 = vsel %vm507, %v731, 0.0
    %762 = vadd.xlane.f32.xlu0 %v761
    %v763 = vpop.xlane.xlu0 %762
    %v764 = vsel %vm507, %v732, 0.0
    %765 = vadd.xlane.f32.xlu0 %v764
    %v766 = vpop.xlane.xlu0 %765
    %v767 = vsel %vm507, %v733, 0.0
    %768 = vadd.xlane.f32.xlu0 %v767
    %v769 = vpop.xlane.xlu0 %768
    %v770 = vsel %vm507, %v734, 0.0
    %771 = vadd.xlane.f32.xlu0 %v770
    %v772 = vpop.xlane.xlu0 %771
    %v773 = vsel %vm507, %v735, 0.0
    %774 = vadd.xlane.f32.xlu0 %v773
    %v775 = vpop.xlane.xlu0 %774
    %v776 = vsel %vm507, %v736, 0.0
    %777 = vadd.xlane.f32.xlu0 %v776
    %v778 = vpop.xlane.xlu0 %777
    %v779 = vsel %vm507, %v737, 0.0
    %780 = vadd.xlane.f32.xlu0 %v779
    %v781 = vpop.xlane.xlu0 %780
    %v782 = vsel %vm507, %v738, 0.0
    %783 = vadd.xlane.f32.xlu0 %v782
    %v784 = vpop.xlane.xlu0 %783
    %v785 = vsel %vm507, %v739, 0.0
    %786 = vadd.xlane.f32.xlu0 %v785
    %v787 = vpop.xlane.xlu0 %786
    %s788 = sld [smem:[#allocation2]]
    %v789 = vstv %s788
    %v790 = vadd.f32 %v742, %v789
    %v791 = vadd.f32 %v745, %v789
    %v792 = vadd.f32 %v748, %v789
    %v793 = vadd.f32 %v751, %v789
    %v794 = vadd.f32 %v754, %v789
    %v795 = vadd.f32 %v757, %v789
    %v796 = vadd.f32 %v760, %v789
    %v797 = vadd.f32 %v763, %v789
    %v798 = vadd.f32 %v766, %v789
    %v799 = vadd.f32 %v769, %v789
    %v800 = vadd.f32 %v772, %v789
    %v801 = vadd.f32 %v775, %v789
    %v802 = vadd.f32 %v778, %v789
    %v803 = vadd.f32 %v781, %v789
    %v804 = vadd.f32 %v784, %v789
    %v805 = vadd.f32 %v787, %v789
    %v822 = vlaneseq
    %v823 = vand.u32 %v822, 127
    %v824 = vlaneseq
    %v825 = vshrl.u32 %v824, 7
    %v826 = vsub.s32 %v823, %v825
    %v827 = vrot.slane %v790, %v826
    %v828 = vadd.s32 %v823, 4294967288
    %v829 = vlaneseq
    %v830 = vshrl.u32 %v829, 7
    %v831 = vsub.s32 %v828, %v830
    %v832 = vrot.slane %v791, %v831
    %vm833 = vcmask 130112
    %v834 = vsel %vm833, %v832, %v827
    %v835 = vadd.s32 %v823, 4294967280
    %v836 = vlaneseq
    %v837 = vshrl.u32 %v836, 7
    %v838 = vsub.s32 %v835, %v837
    %v839 = vrot.slane %v792, %v838
    %vm840 = vcmask 195712
    %v841 = vsel %vm840, %v839, %v834
    %v842 = vadd.s32 %v823, 4294967272
    %v843 = vlaneseq
    %v844 = vshrl.u32 %v843, 7
    %v845 = vsub.s32 %v842, %v844
    %v846 = vrot.slane %v793, %v845
    %vm847 = vcmask 261312
    %v848 = vsel %vm847, %v846, %v841
    %v849 = vadd.s32 %v823, 4294967264
    %v850 = vlaneseq
    %v851 = vshrl.u32 %v850, 7
    %v852 = vsub.s32 %v849, %v851
    %v853 = vrot.slane %v794, %v852
    %vm854 = vcmask 326912
    %v855 = vsel %vm854, %v853, %v848
    %v856 = vadd.s32 %v823, 4294967256
    %v857 = vlaneseq
    %v858 = vshrl.u32 %v857, 7
    %v859 = vsub.s32 %v856, %v858
    %v860 = vrot.slane %v795, %v859
    %vm861 = vcmask 392512
    %v862 = vsel %vm861, %v860, %v855
    %v863 = vadd.s32 %v823, 4294967248
    %v864 = vlaneseq
    %v865 = vshrl.u32 %v864, 7
    %v866 = vsub.s32 %v863, %v865
    %v867 = vrot.slane %v796, %v866
    %vm868 = vcmask 458112
    %v869 = vsel %vm868, %v867, %v862
    %v870 = vadd.s32 %v823, 4294967240
    %v871 = vlaneseq
    %v872 = vshrl.u32 %v871, 7
    %v873 = vsub.s32 %v870, %v872
    %v874 = vrot.slane %v797, %v873
    %vm875 = vcmask 523712
    %v876 = vsel %vm875, %v874, %v869
    %v877 = vadd.s32 %v823, 4294967232
    %v878 = vlaneseq
    %v879 = vshrl.u32 %v878, 7
    %v880 = vsub.s32 %v877, %v879
    %v881 = vrot.slane %v798, %v880
    %vm882 = vcmask 589312
    %v883 = vsel %vm882, %v881, %v876
    %v884 = vadd.s32 %v823, 4294967224
    %v885 = vlaneseq
    %v886 = vshrl.u32 %v885, 7
    %v887 = vsub.s32 %v884, %v886
    %v888 = vrot.slane %v799, %v887
    %vm889 = vcmask 654912
    %v890 = vsel %vm889, %v888, %v883
    %v891 = vadd.s32 %v823, 4294967216
    %v892 = vlaneseq
    %v893 = vshrl.u32 %v892, 7
    %v894 = vsub.s32 %v891, %v893
    %v895 = vrot.slane %v800, %v894
    %vm896 = vcmask 720512
    %v897 = vsel %vm896, %v895, %v890
    %v898 = vadd.s32 %v823, 4294967208
    %v899 = vlaneseq
    %v900 = vshrl.u32 %v899, 7
    %v901 = vsub.s32 %v898, %v900
    %v902 = vrot.slane %v801, %v901
    %vm903 = vcmask 786112
    %v904 = vsel %vm903, %v902, %v897
    %v905 = vadd.s32 %v823, 4294967200
    %v906 = vlaneseq
    %v907 = vshrl.u32 %v906, 7
    %v908 = vsub.s32 %v905, %v907
    %v909 = vrot.slane %v802, %v908
    %vm910 = vcmask 851712
    %v911 = vsel %vm910, %v909, %v904
    %v912 = vadd.s32 %v823, 4294967192
    %v913 = vlaneseq
    %v914 = vshrl.u32 %v913, 7
    %v915 = vsub.s32 %v912, %v914
    %v916 = vrot.slane %v803, %v915
    %vm917 = vcmask 917312
    %v918 = vsel %vm917, %v916, %v911
    %v919 = vadd.s32 %v823, 4294967184
    %v920 = vlaneseq
    %v921 = vshrl.u32 %v920, 7
    %v922 = vsub.s32 %v919, %v921
    %v923 = vrot.slane %v804, %v922
    %vm924 = vcmask 982912
    %v925 = vsel %vm924, %v923, %v918
    %v926 = vadd.s32 %v823, 4294967176
    %v927 = vlaneseq
    %v928 = vshrl.u32 %v927, 7
    %v929 = vsub.s32 %v926, %v928
    %v930 = vrot.slane %v805, %v929
    %vm931 = vcmask 1048512
    %v932 = vsel %vm931, %v930, %v925
    %934 = vst [vmem:[#allocation3] sm:$0x1] %v932
    // Predicated region
    $region38: #{tpu_custom_call.1} parent=1 // pred_check
      _
    $region39: #{tpu_custom_call.1} parent=1 // pred_check_branch
      %936 = sbr.rel (0) target = $region41
    $region40: #{tpu_custom_call.1} parent=1 // pred_region
      %s938 = ssub.s32 16, 16
      %939 = vsyncadd [#allocation4], %s938
      %s941 = sshll.u32 [#allocation3], 4
      %s942 = int_to_ptr.vmem [resolvable:$true] %s941
      %944 = dma.vmem_to_hbm [thread:$0]  %s942, 16, %s9, [#allocation4]
    $region41: #{tpu_custom_call.1} parent=1 // pred_fallthru
      _
    // Predicated region
    $region42: #{tpu_custom_call.1} parent=1 // pred_check
      _
    $region43: #{tpu_custom_call.1} parent=1 // pred_check_branch
      %946 = sbr.rel (0) target = $region45
    $region44: #{tpu_custom_call.1} parent=1 // pred_region
      %947 = dma.done [#allocation4], 16
    $region45: #{tpu_custom_call.1} parent=1 // pred_fallthru
      _
    %948 = vsyncpa [#allocation4], 1

</llo_original>
